<compile_context>
chip_gen: v6e
topology: v6e:2x2x1
jax: 0.10.0
libtpu: 0.0.40
codegen_flags: <defaults>
</compile_context>

<pallas_src>
import jax
import jax.numpy as jnp
from jax.experimental import pallas as pl
from jax.experimental.pallas import tpu as pltpu

ALPHA = 0.2        # LeakyReLU negative slope used by GATConv
NEG = -9e15        # non-edge mask value (kept in f32)
LANE = 128


def _pad_last(x, target):
    pad = target - x.shape[-1]
    if pad == 0:
        return x
    return jnp.pad(x, [(0, 0)] * (x.ndim - 1) + [(0, pad)])


# ---------------------------------------------------------------------------
# Kernel 1: batched feature projection  Wh = hs_flat @ W_pad
# (all M*N rows in one MXU matmul; lane-dense (.., 128) output)
# ---------------------------------------------------------------------------
def project_kernel(h_ref, w_ref, wh_ref):
    wh_ref[...] = jnp.dot(h_ref[...], w_ref[...],
                          preferred_element_type=jnp.float32)


def project_forward(hs_flat, w_pad, tile_rows=None):
    MN, F = hs_flat.shape
    Dp = w_pad.shape[1]
    if tile_rows is None:
        tile_rows = MN if MN <= 1024 else 512
    assert MN % tile_rows == 0 and (tile_rows % 8 == 0 or tile_rows == MN)
    return pl.pallas_call(
        project_kernel,
        out_shape=jax.ShapeDtypeStruct((MN, Dp), jnp.float32),
        grid_spec=pltpu.PrefetchScalarGridSpec(
            num_scalar_prefetch=0,
            grid=(MN // tile_rows,),
            in_specs=[
                pl.BlockSpec((tile_rows, F), lambda i: (i, 0)),
                pl.BlockSpec((F, Dp), lambda i: (0, 0)),
            ],
            out_specs=pl.BlockSpec((tile_rows, Dp), lambda i: (i, 0)),
        ),
        compiler_params=pltpu.CompilerParams(dimension_semantics=("parallel",)),
    )(hs_flat, w_pad)


# ---------------------------------------------------------------------------
# Kernel 2: fused GAT attention (per metapath) + semantic attention finalize.
# Grid iterates over metapaths; z_m is kept in VMEM scratch; the semantic
# softmax + weighted sum runs once at the last grid step.
# ---------------------------------------------------------------------------
def make_han_fused_kernel(M, N):
    inv_n = 1.0 / float(N)

    def kernel(wh_ref, adj_ref, a12_ref, wp_ref, bp_ref, q_ref, out_ref, z_scratch):
        m = pl.program_id(0)
        Wh = wh_ref[0]                                    # (N, Dp) f32
        A = adj_ref[0].astype(jnp.float32)                # int8 mask -> f32

        # e[i, j] = LeakyReLU(a1 . Wh_i + a2 . Wh_j): one (N,Dp)@(Dp,2) matmul,
        # then only an (N,1) column is transposed (not the whole Wh).
        fa = jnp.dot(Wh, a12_ref[...], preferred_element_type=jnp.float32)  # (N, 2)
        e = fa[:, 0:1] + fa[:, 1:2].T                                        # (N, N)
        e = jnp.where(e > 0, e, ALPHA * e)                                   # LeakyReLU

        logits = jnp.where(A > 0, e, jnp.float32(NEG))                       # mask non-edges
        logits = logits - jnp.max(logits, axis=1, keepdims=True)
        p = jnp.exp(logits)
        att = p / jnp.sum(p, axis=1, keepdims=True)                          # row softmax
        # (attention dropout skipped: eval mode)

        z = jnp.dot(att, Wh, preferred_element_type=jnp.float32)             # (N, Dp)
        z = jnp.where(z > 0, z, jnp.exp(jnp.minimum(z, 0.0)) - 1.0)          # safe ELU
        z_scratch[m] = z

        # Semantic attention: runs once, with every z_m resident in VMEM.
        @pl.when(m == M - 1)
        def _():
            scores = []
            for mm in range(M):
                t = jnp.tanh(
                    jnp.dot(z_scratch[mm], wp_ref[...],
                            preferred_element_type=jnp.float32) + bp_ref[...])
                scores.append(jnp.sum(t * q_ref[...]) * inv_n)               # scalar s_m
            mx = scores[0]
            for mm in range(1, M):
                mx = jnp.maximum(mx, scores[mm])
            exps = [jnp.exp(s - mx) for s in scores]
            denom = exps[0]
            for mm in range(1, M):
                denom = denom + exps[mm]
            acc = (exps[0] / denom) * z_scratch[0]
            for mm in range(1, M):
                acc = acc + (exps[mm] / denom) * z_scratch[mm]
            out_ref[...] = acc

    return kernel


def han_layer_forward(hs, adj, params):
    M, N, F = hs.shape
    D = params["W"].shape[1]
    Dp = ((D + LANE - 1) // LANE) * LANE

    # Zero-pad parameters so all kernel outputs are lane-dense (exact semantics).
    W_pad = _pad_last(params["W"], Dp)                                  # (F, Dp)
    a12 = jnp.concatenate([params["a1"], params["a2"]], axis=0).T       # (D, 2)
    a12_pad = jnp.pad(a12, ((0, Dp - D), (0, 0)))                       # (Dp, 2)
    Wp_pad = jnp.pad(params["Wp"], ((0, Dp - D), (0, Dp - D)))          # (Dp, Dp)
    bp_pad = _pad_last(params["bp"], Dp)                                # (1, Dp)
    q_pad = _pad_last(params["q"], Dp)                                  # (1, Dp)

    # Keep the O(N^2) adjacency in int8 (mask-only semantics: adj > 0).
    adj_i8 = (adj != 0).astype(jnp.int8)                                # (M, N, N)

    # Stage 1: batched projection over all metapaths at once.
    wh = project_forward(hs.reshape(M * N, F), W_pad).reshape(M, N, Dp)

    # Stage 2: fused per-metapath GAT attention + semantic fusion.
    out_pad = pl.pallas_call(
        make_han_fused_kernel(M, N),
        out_shape=jax.ShapeDtypeStruct((N, Dp), jnp.float32),
        grid_spec=pltpu.PrefetchScalarGridSpec(
            num_scalar_prefetch=0,
            grid=(M,),
            in_specs=[
                pl.BlockSpec((1, N, Dp), lambda m: (m, 0, 0)),   # Wh_m
                pl.BlockSpec((1, N, N), lambda m: (m, 0, 0)),    # adj_m (int8)
                pl.BlockSpec((Dp, 2), lambda m: (0, 0)),         # [a1 | a2]
                pl.BlockSpec((Dp, Dp), lambda m: (0, 0)),        # Wp
                pl.BlockSpec((1, Dp), lambda m: (0, 0)),         # bp
                pl.BlockSpec((1, Dp), lambda m: (0, 0)),         # q
            ],
            out_specs=pl.BlockSpec((N, Dp), lambda m: (0, 0)),
            scratch_shapes=[pltpu.VMEM((M, N, Dp), jnp.float32)],
        ),
        # Metapath axis carries z_scratch + the final write, so it must be
        # "arbitrary" (an unfused GAT-only variant could be "parallel" on v7x).
        compiler_params=pltpu.CompilerParams(dimension_semantics=("arbitrary",)),
    )(wh, adj_i8, a12_pad, Wp_pad, bp_pad, q_pad)

    return out_pad[:, :D]


# ---------------------------------------------------------------------------
# Pure-JAX reference (mirrors the PyTorch forward, eval mode).
# ---------------------------------------------------------------------------
def reference_han(hs, adj, params):
    M = hs.shape[0]
    zs = []
    for m in range(M):
        Wh = hs[m] @ params["W"]
        f1 = jnp.sum(Wh * params["a1"], axis=1, keepdims=True)          # (N, 1)
        f2 = jnp.sum(Wh * params["a2"], axis=1, keepdims=True)          # (N, 1)
        e = f1 + f2.T
        e = jnp.where(e > 0, e, ALPHA * e)
        att = jnp.where(adj[m] > 0, e, NEG)
        att = jax.nn.softmax(att, axis=1)
        hp = att @ Wh
        zs.append(jnp.where(hp > 0, hp, jnp.exp(jnp.minimum(hp, 0.0)) - 1.0))
    z = jnp.stack(zs)                                                   # (M, N, D)
    t = jnp.tanh(jnp.einsum("mnd,dh->mnh", z, params["Wp"]) + params["bp"][None])
    s = jnp.einsum("mnh,h->mn", t, params["q"][0])                      # (M, N)
    beta = jax.nn.softmax(jnp.mean(s, axis=1))                          # (M,)
    return jnp.einsum("m,mnd->nd", beta, z)


if __name__ == "__main__":
    # M metapaths, N nodes, in_size F == out_size D (matches SemanticAttention(in, out)).
    M, N, F, D = 3, 64, 32, 32

    key = jax.random.PRNGKey(0)
    keys = jax.random.split(key, 8)

    hs = jax.random.normal(keys[0], (M, N, F), jnp.float32)
    adj_rand = (jax.random.uniform(keys[1], (M, N, N)) < 0.3).astype(jnp.float32)
    adj = jnp.maximum(adj_rand, jnp.eye(N, dtype=jnp.float32)[None])    # self-loops

    params = dict(
        W=jax.random.normal(keys[2], (F, D), jnp.float32) / jnp.sqrt(float(F)),
        a1=jax.random.normal(keys[3], (1, D), jnp.float32) * 0.1,
        a2=jax.random.normal(keys[4], (1, D), jnp.float32) * 0.1,
        Wp=jax.random.normal(keys[5], (D, D), jnp.float32) / jnp.sqrt(float(D)),
        bp=jax.random.normal(keys[6], (1, D), jnp.float32) * 0.1,
        q=jax.random.normal(keys[7], (1, D), jnp.float32) * 0.1,
    )

    out = jax.block_until_ready(han_layer_forward(hs, adj, params))
    ref = reference_han(hs, adj, params)

    assert out.shape == (N, D), out.shape
    if not bool(jnp.allclose(out, ref, rtol=2e-2, atol=2e-2)):
        raise SystemExit("mismatch vs pure-JAX reference")
    print("KERNEL_OK")
</pallas_src>

<mosaic_0001>
module attributes {stable_mosaic.version = 11 : i64} {
  func.func @project_kernel(%arg0: i32, %arg1: memref<192x32xf32, #tpu.memory_space<vmem>>, %arg2: memref<32x128xf32, #tpu.memory_space<vmem>>, %arg3: memref<192x128xf32, #tpu.memory_space<vmem>>) attributes {dimension_semantics = [#tpu.dimension_semantics<parallel>], iteration_bounds = array<i64: 1>, scalar_prefetch = 0 : i64, scratch_operands = 0 : i64, tpu.core_type = #tpu.core_type<tc>, window_params = [{transform_indices = @transform_0, window_bounds = array<i64: 192, 32>}, {pipeline_mode = #tpu.pipeline_mode<synchronous>, transform_indices = @transform_1, window_bounds = array<i64: 32, 128>}, {transform_indices = @transform_2, window_bounds = array<i64: 192, 128>}]} {
    %c0 = arith.constant 0 : index
    %c0_0 = arith.constant 0 : index
    %0 = vector.load %arg1[%c0, %c0_0] : memref<192x32xf32, #tpu.memory_space<vmem>>, vector<192x32xf32>
    %c0_1 = arith.constant 0 : index
    %c0_2 = arith.constant 0 : index
    %1 = vector.load %arg2[%c0_1, %c0_2] : memref<32x128xf32, #tpu.memory_space<vmem>>, vector<32x128xf32>
    %cst = arith.constant dense<0.000000e+00> : vector<192x128xf32>
    %2 = tpu.matmul %0, %1, %cst {dimension_numbers = #tpu.dot_dimension_numbers<[1], [0], [0], [1], [0, 0, 1, 1], [], []>} : vector<192x32xf32>, vector<32x128xf32>, vector<192x128xf32> -> vector<192x128xf32>
    %c0_3 = arith.constant 0 : index
    %c0_4 = arith.constant 0 : index
    %3 = vector.load %arg3[%c0_3, %c0_4] : memref<192x128xf32, #tpu.memory_space<vmem>>, vector<192x128xf32>
    tpu.vector_store %arg3[%c0_3, %c0_4], %2 {strides = array<i32>} : memref<192x128xf32, #tpu.memory_space<vmem>>, vector<192x128xf32>,
    return
  }
  func.func @transform_0(%arg0: i32) -> (i32, i32) {
    %c0_i32 = arith.constant 0 : i32
    %c0_i32_0 = arith.constant 0 : i32
    return %arg0, %c0_i32 : i32, i32
  }
  func.func @transform_1(%arg0: i32) -> (i32, i32) {
    %c0_i32 = arith.constant 0 : i32
    %c0_i32_0 = arith.constant 0 : i32
    %c0_i32_1 = arith.constant 0 : i32
    return %c0_i32, %c0_i32_0 : i32, i32
  }
  func.func @transform_2(%arg0: i32) -> (i32, i32) {
    %c0_i32 = arith.constant 0 : i32
    %c0_i32_0 = arith.constant 0 : i32
    return %arg0, %c0_i32 : i32, i32
  }
}

</mosaic_0001>

<llo_original>
// kernel: tpu_custom_call.1
$region0: #{tpu_custom_call.1}
  #allocation0 [shape = 'u32[]', space=smem, size = 0x4, offset = 0x4, fixed_abs, tag = 'smem constant byte address 0x4 - core index']
  #allocation1 [shape = 'u32[144,128]{1,0:T(1,128)}', space=vmem, size = 0x12000, scoped, tag = 'internal scratch']
  %s0 = inlined_call_operand.vmem [shape: f32[192,32], index: 0, kind: input, shape index: {}]
  %s1 = inlined_call_operand.vmem [shape: f32[32,128], index: 1, kind: input, shape index: {}]
  %s2 = inlined_call_operand.hbm [shape: f32[192,128], index: 2, kind: output, shape index: {}]
  %s3 = sld [smem:[#allocation0]]
  $region18: #{tpu_custom_call.1} parent=0
    _
  %s5 = ssub.s32 1, %s3
  %s6 = scalar_select 0, %s5, %s3
  $region1: #{tpu_custom_call.1} parent=0
    #allocation2 [shape = 'u8[98304]{0}', space=vmem, size = 0x18000, scoped, tag = 'output window, operand 0, single buffered']
    #allocation3 [shape = 's32[1]{0}', space=sflag, size = 0x4, scoped, tag = 'scoped memory for tpu_custom_call.1']
    %7 = vsyncpa [#allocation3], 0
    // Predicated region
    $region2: #{tpu_custom_call.1} parent=1 // pred_check
      _
    $region3: #{tpu_custom_call.1} parent=1 // pred_check_branch
      %9 = sbr.rel (0) target = $region5
    $region4: #{tpu_custom_call.1} parent=1 // pred_region
      _
    $region5: #{tpu_custom_call.1} parent=1 // pred_fallthru
      _
    // Predicated region
    $region6: #{tpu_custom_call.1} parent=1 // pred_check
      _
    $region7: #{tpu_custom_call.1} parent=1 // pred_check_branch
      %11 = sbr.rel (0) target = $region9
    $region8: #{tpu_custom_call.1} parent=1 // pred_region
      _
    $region9: #{tpu_custom_call.1} parent=1 // pred_fallthru
      _
    %v12 = vld [vmem:[%s0] sm:$0xff]
    %v13 = vld [vmem:[%s0 + $0x8] sm:$0xff]
    %v14 = vld [vmem:[%s0 + $0x10] sm:$0xff]
    %v15 = vld [vmem:[%s0 + $0x18] sm:$0xff]
    %v16 = vld [vmem:[%s0 + $0x20] sm:$0xff]
    %v17 = vld [vmem:[%s0 + $0x28] sm:$0xff]
    %v18 = vld [vmem:[%s0 + $0x30] sm:$0xff]
    %v19 = vld [vmem:[%s0 + $0x38] sm:$0xff]
    %v20 = vld [vmem:[%s0 + $0x40] sm:$0xff]
    %v21 = vld [vmem:[%s0 + $0x48] sm:$0xff]
    %v22 = vld [vmem:[%s0 + $0x50] sm:$0xff]
    %v23 = vld [vmem:[%s0 + $0x58] sm:$0xff]
    %v24 = vld [vmem:[%s0 + $0x60] sm:$0xff]
    %v25 = vld [vmem:[%s0 + $0x68] sm:$0xff]
    %v26 = vld [vmem:[%s0 + $0x70] sm:$0xff]
    %v27 = vld [vmem:[%s0 + $0x78] sm:$0xff]
    %v28 = vld [vmem:[%s0 + $0x80] sm:$0xff]
    %v29 = vld [vmem:[%s0 + $0x88] sm:$0xff]
    %v30 = vld [vmem:[%s0 + $0x90] sm:$0xff]
    %v31 = vld [vmem:[%s0 + $0x98] sm:$0xff]
    %v32 = vld [vmem:[%s0 + $0xa0] sm:$0xff]
    %v33 = vld [vmem:[%s0 + $0xa8] sm:$0xff]
    %v34 = vld [vmem:[%s0 + $0xb0] sm:$0xff]
    %v35 = vld [vmem:[%s0 + $0xb8] sm:$0xff]
    %v36 = vld [vmem:[%s1] sm:$0xff]
    %v37 = vld [vmem:[%s1 + $0x8] sm:$0xff]
    %v38 = vld [vmem:[%s1 + $0x10] sm:$0xff]
    %v39 = vld [vmem:[%s1 + $0x18] sm:$0xff]
    %vm40 = vcmask 261120
    %v42 = vsel %vm40, %v12, 0
    %v45 = vsel %vm40, %v13, 0
    %v48 = vsel %vm40, %v14, 0
    %v51 = vsel %vm40, %v15, 0
    %v54 = vsel %vm40, %v16, 0
    %v57 = vsel %vm40, %v17, 0
    %v60 = vsel %vm40, %v18, 0
    %v63 = vsel %vm40, %v19, 0
    %v66 = vsel %vm40, %v20, 0
    %v69 = vsel %vm40, %v21, 0
    %v72 = vsel %vm40, %v22, 0
    %v75 = vsel %vm40, %v23, 0
    %v78 = vsel %vm40, %v24, 0
    %v81 = vsel %vm40, %v25, 0
    %v84 = vsel %vm40, %v26, 0
    %v87 = vsel %vm40, %v27, 0
    %v90 = vsel %vm40, %v28, 0
    %v93 = vsel %vm40, %v29, 0
    %v96 = vsel %vm40, %v30, 0
    %v99 = vsel %vm40, %v31, 0
    %v102 = vsel %vm40, %v32, 0
    %v105 = vsel %vm40, %v33, 0
    %v108 = vsel %vm40, %v34, 0
    %v111 = vsel %vm40, %v35, 0
    %113 = vmatprep.subr.mxu0 0.0
    %114 = vmatpush1.msra.mxu0 0.0
    %115 = vmatprep.subr.mxu0 0.0
    %116 = vmatpush1.msra.mxu0 0.0
    %117 = vmatprep.subr.mxu0 0.0
    %118 = vmatpush1.msra.mxu0 0.0
    %119 = vmatprep.subr.mxu0 0.0
    %120 = vmatpush1.msra.mxu0 0.0
    %121 = vmatprep.subr.mxu0 0.0
    %122 = vmatpush1.msra.mxu0 0.0
    %123 = vmatprep.subr.mxu0 0.0
    %124 = vmatpush1.msra.mxu0 0.0
    %125 = vmatprep.subr.mxu0 0.0
    %126 = vmatpush1.msra.mxu0 0.0
    %127 = vmatprep.subr.mxu0 0.0
    %128 = vmatpush1.msra.mxu0 0.0
    %129 = vmatprep.subr.mxu0 0.0
    %130 = vmatpush1.msra.mxu0 0.0
    %131 = vmatprep.subr.mxu0 0.0
    %132 = vmatpush1.msra.mxu0 0.0
    %133 = vmatprep.subr.mxu0 0.0
    %134 = vmatpush1.msra.mxu0 0.0
    %135 = vmatprep.subr.mxu0 0.0
    %136 = vmatpush1.msra.mxu0 0.0
    %137 = vmatprep.subr.mxu0 0.0
    %138 = vmatpush1.msra.mxu0 %v39
    %139 = vmatprep.subr.mxu0 0.0
    %140 = vmatpush1.msra.mxu0 %v38
    %141 = vmatprep.subr.mxu0 0.0
    %142 = vmatpush1.msra.mxu0 %v37
    %143 = vmatprep.subr.mxu0 0.0
    %144 = vmatpush1.msra.mxu0 %v36
    %145 = vmatprep.subr.mxu0 0.0
    %146 = vmatpush2.msra.mxu0 0.0
    %147 = vmatprep.subr.mxu0 0.0
    %148 = vmatpush2.msra.mxu0 0.0
    %149 = vmatprep.subr.mxu0 0.0
    %150 = vmatpush2.msra.mxu0 0.0
    %151 = vmatprep.subr.mxu0 0.0
    %152 = vmatpush2.msra.mxu0 0.0
    %153 = vmatprep.subr.mxu0 0.0
    %154 = vmatpush2.msra.mxu0 0.0
    %155 = vmatprep.subr.mxu0 0.0
    %156 = vmatpush2.msra.mxu0 0.0
    %157 = vmatprep.subr.mxu0 0.0
    %158 = vmatpush2.msra.mxu0 0.0
    %159 = vmatprep.subr.mxu0 0.0
    %160 = vmatpush2.msra.mxu0 0.0
    %161 = vmatprep.subr.mxu0 0.0
    %162 = vmatpush2.msra.mxu0 0.0
    %163 = vmatprep.subr.mxu0 0.0
    %164 = vmatpush2.msra.mxu0 0.0
    %165 = vmatprep.subr.mxu0 0.0
    %166 = vmatpush2.msra.mxu0 0.0
    %167 = vmatprep.subr.mxu0 0.0
    %168 = vmatpush2.msra.mxu0 0.0
    %169 = vmatprep.subr.mxu0 0.0
    %170 = vmatpush2.msra.mxu0 0.0
    %171 = vmatprep.subr.mxu0 0.0
    %172 = vmatpush2.msra.mxu0 0.0
    %173 = vmatprep.subr.mxu0 0.0
    %174 = vmatpush2.msra.mxu0 0.0
    %175 = vmatprep.subr.mxu0 0.0
    %176 = vmatpush2.msra.mxu0 0.0
    %177 = vmatprep.mubr.f32.mxu0 0.0
    %178 = vmatmul.mubr.f32.gmra.mxu0 %v42
    %v179 = vpop.f32.mrf.mxu0
    %v180 = vadd.f32 0.0, %v179
    %v181 = vpop.f32.mrf.mxu0
    %182 = vmatprep.mubr.f32.mxu0 0.0
    %183 = vmatmul.mubr.f32.gmra.mxu0 %v45
    %v184 = vpop.f32.mrf.mxu0
    %v185 = vadd.f32 0.0, %v184
    %v186 = vpop.f32.mrf.mxu0
    %187 = vmatprep.mubr.f32.mxu0 0.0
    %188 = vmatmul.mubr.f32.gmra.mxu0 %v48
    %v189 = vpop.f32.mrf.mxu0
    %v190 = vadd.f32 0.0, %v189
    %v191 = vpop.f32.mrf.mxu0
    %192 = vmatprep.mubr.f32.mxu0 0.0
    %193 = vmatmul.mubr.f32.gmra.mxu0 %v51
    %v194 = vpop.f32.mrf.mxu0
    %v195 = vadd.f32 0.0, %v194
    %v196 = vpop.f32.mrf.mxu0
    %197 = vmatprep.mubr.f32.mxu0 0.0
    %198 = vmatmul.mubr.f32.gmra.mxu0 %v54
    %v199 = vpop.f32.mrf.mxu0
    %v200 = vadd.f32 0.0, %v199
    %v201 = vpop.f32.mrf.mxu0
    %202 = vmatprep.mubr.f32.mxu0 0.0
    %203 = vmatmul.mubr.f32.gmra.mxu0 %v57
    %v204 = vpop.f32.mrf.mxu0
    %v205 = vadd.f32 0.0, %v204
    %v206 = vpop.f32.mrf.mxu0
    %207 = vmatprep.mubr.f32.mxu0 0.0
    %208 = vmatmul.mubr.f32.gmra.mxu0 %v60
    %v209 = vpop.f32.mrf.mxu0
    %v210 = vadd.f32 0.0, %v209
    %v211 = vpop.f32.mrf.mxu0
    %212 = vmatprep.mubr.f32.mxu0 0.0
    %213 = vmatmul.mubr.f32.gmra.mxu0 %v63
    %v214 = vpop.f32.mrf.mxu0
    %v215 = vadd.f32 0.0, %v214
    %v216 = vpop.f32.mrf.mxu0
    %217 = vmatprep.mubr.f32.mxu0 0.0
    %218 = vmatmul.mubr.f32.gmra.mxu0 %v66
    %v219 = vpop.f32.mrf.mxu0
    %v220 = vadd.f32 0.0, %v219
    %v221 = vpop.f32.mrf.mxu0
    %222 = vmatprep.mubr.f32.mxu0 0.0
    %223 = vmatmul.mubr.f32.gmra.mxu0 %v69
    %v224 = vpop.f32.mrf.mxu0
    %v225 = vadd.f32 0.0, %v224
    %v226 = vpop.f32.mrf.mxu0
    %227 = vmatprep.mubr.f32.mxu0 0.0
    %228 = vmatmul.mubr.f32.gmra.mxu0 %v72
    %v229 = vpop.f32.mrf.mxu0
    %v230 = vadd.f32 0.0, %v229
    %v231 = vpop.f32.mrf.mxu0
    %232 = vmatprep.mubr.f32.mxu0 0.0
    %233 = vmatmul.mubr.f32.gmra.mxu0 %v75
    %v234 = vpop.f32.mrf.mxu0
    %v235 = vadd.f32 0.0, %v234
    %v236 = vpop.f32.mrf.mxu0
    %237 = vmatprep.mubr.f32.mxu0 0.0
    %238 = vmatmul.mubr.f32.gmra.mxu0 %v78
    %v239 = vpop.f32.mrf.mxu0
    %v240 = vadd.f32 0.0, %v239
    %v241 = vpop.f32.mrf.mxu0
    %242 = vmatprep.mubr.f32.mxu0 0.0
    %243 = vmatmul.mubr.f32.gmra.mxu0 %v81
    %v244 = vpop.f32.mrf.mxu0
    %v245 = vadd.f32 0.0, %v244
    %v246 = vpop.f32.mrf.mxu0
    %247 = vmatprep.mubr.f32.mxu0 0.0
    %248 = vmatmul.mubr.f32.gmra.mxu0 %v84
    %v249 = vpop.f32.mrf.mxu0
    %v250 = vadd.f32 0.0, %v249
    %v251 = vpop.f32.mrf.mxu0
    %252 = vmatprep.mubr.f32.mxu0 0.0
    %253 = vmatmul.mubr.f32.gmra.mxu0 %v87
    %v254 = vpop.f32.mrf.mxu0
    %v255 = vadd.f32 0.0, %v254
    %v256 = vpop.f32.mrf.mxu0
    %257 = vmatprep.mubr.f32.mxu0 0.0
    %258 = vmatmul.mubr.f32.gmra.mxu0 %v90
    %v259 = vpop.f32.mrf.mxu0
    %v260 = vadd.f32 0.0, %v259
    %v261 = vpop.f32.mrf.mxu0
    %262 = vmatprep.mubr.f32.mxu0 0.0
    %263 = vmatmul.mubr.f32.gmra.mxu0 %v93
    %v264 = vpop.f32.mrf.mxu0
    %v265 = vadd.f32 0.0, %v264
    %v266 = vpop.f32.mrf.mxu0
    %267 = vmatprep.mubr.f32.mxu0 0.0
    %268 = vmatmul.mubr.f32.gmra.mxu0 %v96
    %v269 = vpop.f32.mrf.mxu0
    %v270 = vadd.f32 0.0, %v269
    %v271 = vpop.f32.mrf.mxu0
    %272 = vmatprep.mubr.f32.mxu0 0.0
    %273 = vmatmul.mubr.f32.gmra.mxu0 %v99
    %v274 = vpop.f32.mrf.mxu0
    %v275 = vadd.f32 0.0, %v274
    %v276 = vpop.f32.mrf.mxu0
    %277 = vmatprep.mubr.f32.mxu0 0.0
    %278 = vmatmul.mubr.f32.gmra.mxu0 %v102
    %v279 = vpop.f32.mrf.mxu0
    %v280 = vadd.f32 0.0, %v279
    %v281 = vpop.f32.mrf.mxu0
    %282 = vmatprep.mubr.f32.mxu0 0.0
    %283 = vmatmul.mubr.f32.gmra.mxu0 %v105
    %v284 = vpop.f32.mrf.mxu0
    %v285 = vadd.f32 0.0, %v284
    %v286 = vpop.f32.mrf.mxu0
    %287 = vmatprep.mubr.f32.mxu0 0.0
    %288 = vmatmul.mubr.f32.gmra.mxu0 %v108
    %v289 = vpop.f32.mrf.mxu0
    %v290 = vadd.f32 0.0, %v289
    %v291 = vpop.f32.mrf.mxu0
    %292 = vmatprep.mubr.f32.mxu0 0.0
    %293 = vmatmul.mubr.f32.gmra.mxu0 %v111
    %v294 = vpop.f32.mrf.mxu0
    %v295 = vadd.f32 0.0, %v294
    %v296 = vpop.f32.mrf.mxu0
    %297 = vdwg.mxu0
    %298 = vst [vmem:[#allocation2] sm:$0xff] %v180
    %299 = vst [vmem:[#allocation2 + $0x8] sm:$0xff] %v185
    %300 = vst [vmem:[#allocation2 + $0x10] sm:$0xff] %v190
    %301 = vst [vmem:[#allocation2 + $0x18] sm:$0xff] %v195
    %302 = vst [vmem:[#allocation2 + $0x20] sm:$0xff] %v200
    %303 = vst [vmem:[#allocation2 + $0x28] sm:$0xff] %v205
    %304 = vst [vmem:[#allocation2 + $0x30] sm:$0xff] %v210
    %305 = vst [vmem:[#allocation2 + $0x38] sm:$0xff] %v215
    %306 = vst [vmem:[#allocation2 + $0x40] sm:$0xff] %v220
    %307 = vst [vmem:[#allocation2 + $0x48] sm:$0xff] %v225
    %308 = vst [vmem:[#allocation2 + $0x50] sm:$0xff] %v230
    %309 = vst [vmem:[#allocation2 + $0x58] sm:$0xff] %v235
    %310 = vst [vmem:[#allocation2 + $0x60] sm:$0xff] %v240
    %311 = vst [vmem:[#allocation2 + $0x68] sm:$0xff] %v245
    %312 = vst [vmem:[#allocation2 + $0x70] sm:$0xff] %v250
    %313 = vst [vmem:[#allocation2 + $0x78] sm:$0xff] %v255
    %314 = vst [vmem:[#allocation2 + $0x80] sm:$0xff] %v260
    %315 = vst [vmem:[#allocation2 + $0x88] sm:$0xff] %v265
    %316 = vst [vmem:[#allocation2 + $0x90] sm:$0xff] %v270
    %317 = vst [vmem:[#allocation2 + $0x98] sm:$0xff] %v275
    %318 = vst [vmem:[#allocation2 + $0xa0] sm:$0xff] %v280
    %319 = vst [vmem:[#allocation2 + $0xa8] sm:$0xff] %v285
    %320 = vst [vmem:[#allocation2 + $0xb0] sm:$0xff] %v290
    %321 = vst [vmem:[#allocation2 + $0xb8] sm:$0xff] %v295
    // Predicated region
    $region10: #{tpu_custom_call.1} parent=1 // pred_check
      _
    $region11: #{tpu_custom_call.1} parent=1 // pred_check_branch
      %323 = sbr.rel (0) target = $region13
    $region12: #{tpu_custom_call.1} parent=1 // pred_region
      %s325 = ssub.s32 3072, 3072
      %326 = vsyncadd [#allocation3], %s325
      %s327 = sshll.u32 [#allocation2], 4
      %s328 = int_to_ptr.vmem [resolvable:$true] %s327
      %333 = dma.vmem_to_hbm [thread:$0]  %s328, 3072, %s2, [#allocation3], 128, 128, 8
    $region13: #{tpu_custom_call.1} parent=1 // pred_fallthru
      _
    // Predicated region
    $region14: #{tpu_custom_call.1} parent=1 // pred_check
      _
    $region15: #{tpu_custom_call.1} parent=1 // pred_check_branch
      %335 = sbr.rel (0) target = $region17
    $region16: #{tpu_custom_call.1} parent=1 // pred_region
      %336 = dma.done [#allocation3], 3072
    $region17: #{tpu_custom_call.1} parent=1 // pred_fallthru
      _
    %337 = vsyncpa [#allocation3], 1

</llo_original>
